<compile_context>
chip_gen: v5e
topology: v5e:2x2
jax: 0.10.0
libtpu: 0.0.40
codegen_flags: <defaults>
</compile_context>

<pallas_src>
import math
import functools

import jax
import jax.numpy as jnp
from jax.experimental import pallas as pl
from jax.experimental.pallas import tpu as pltpu

_LANES = 128
_SUBLANES = 8


def _round_up(x: int, m: int) -> int:
    return (x + m - 1) // m * m


def _pos_enc_kernel(idx_ref, div_ref, o_ref, *, ignored_index):
    # idx_ref : (TS, 1) int32 per-tile indices
    # div_ref : (1, E)  f32   grid-resident div_term (same block every step)
    # o_ref   : (TS, E) f32
    idx_i = idx_ref[...]                                   # (TS, 1) int32
    idx_f = idx_i.astype(jnp.float32)                      # (TS, 1) f32
    phase = idx_f * div_ref[...]                           # (TS, E) f32

    # Select cos on odd embedding dims, sin on even dims (bit-faithful to the
    # reference cos*mult0 + sin*mult1 with 0/1 multipliers).
    lane = jax.lax.broadcasted_iota(jnp.int32, div_ref.shape, 1)   # (1, E)
    is_odd = (lane % 2) == 1
    trig = jnp.where(is_odd, jnp.cos(phase), jnp.sin(phase))       # (TS, E)

    ignored = idx_i == ignored_index                        # (TS, 1) bool
    o_ref[...] = jnp.where(ignored, jnp.float32(0.0), trig)


def make_positional_encoding_params(embedding_dim: int):
    """Deterministic buffer equivalent to the PyTorch __init__ div_term."""
    e = jnp.arange(embedding_dim, dtype=jnp.int32)
    div_term = jnp.exp(
        ((e // 2) * 2).astype(jnp.float32) * (-math.log(10000.0) / embedding_dim)
    )                                                       # (E,)
    return div_term


def positional_encoding(indices, div_term, ignored_index: int = -100):
    """indices: (S,) int32  ->  (S, E) float32 positional encodings."""
    S = int(indices.shape[0])
    E = int(div_term.shape[0])

    # NOTE: float32 cast of indices is exact only for |index| < 2^24; fine for
    # realistic sequence positions (same limitation as the PyTorch module).
    idx2d = indices.astype(jnp.int32).reshape(S, 1)
    div2d = div_term.astype(jnp.float32).reshape(1, E)

    # Row-tile selection:
    #   * last two block dims must be multiples of (8, 128) or equal the full
    #     array dims; we keep E full (masked tail vst only) and TS % 8 == 0
    #     (or TS == S when S <= 8).
    #   * ~4 MiB per output buffer (double-buffered ~8 MiB) keeps every
    #     generation inside its scoped-VMEM default without raising limits.
    #   * aim for >= 4 grid steps so v7x can shard rows across both
    #     TensorCores and write-back overlaps compute on v5e/v6e too.
    if S <= _SUBLANES:
        TS = S
    else:
        bytes_per_row = E * 4
        max_rows_by_vmem = max(_SUBLANES, (4 * 1024 * 1024) // bytes_per_row)
        ts_cap = max(_SUBLANES,
                     (min(8192, max_rows_by_vmem) // _SUBLANES) * _SUBLANES)
        rows_for_steps = _round_up(pl.cdiv(S, 4), _SUBLANES)
        TS = max(_SUBLANES, min(ts_cap, rows_for_steps))
    grid = pl.cdiv(S, TS)

    cost = pl.CostEstimate(
        flops=2 * S * E,
        transcendentals=2 * S * E,
        bytes_accessed=S * E * 4 + S * 4 + E * 4,
    )

    kernel = functools.partial(_pos_enc_kernel, ignored_index=ignored_index)
    out = pl.pallas_call(
        kernel,
        out_shape=jax.ShapeDtypeStruct((S, E), jnp.float32),
        grid=(grid,),
        in_specs=[
            pl.BlockSpec((TS, 1), lambda i: (i, 0)),        # per-tile indices
            pl.BlockSpec((1, E), lambda i: (0, 0)),         # resident div_term
        ],
        out_specs=pl.BlockSpec((TS, E), lambda i: (i, 0)),
        compiler_params=pltpu.CompilerParams(
            dimension_semantics=("parallel",)),
        cost_estimate=cost,
    )(idx2d, div2d)
    return out


def _reference(indices, embedding_dim, ignored_index=-100):
    """Pure-JAX reference matching the original PyTorch cos/sin formulation."""
    e = jnp.arange(embedding_dim, dtype=jnp.int32)
    div_term = jnp.exp(
        ((e // 2) * 2).astype(jnp.float32) * (-math.log(10000.0) / embedding_dim))
    multiplier = jnp.zeros((2, embedding_dim), dtype=jnp.float32)
    multiplier = multiplier.at[0, 1::2].set(1.0)   # cos multiplier (odd dims)
    multiplier = multiplier.at[1, 0::2].set(1.0)   # sin multiplier (even dims)
    phase = indices.astype(jnp.float32)[:, None] * div_term[None, :]
    res = (jnp.cos(phase) * multiplier[0][None, :]
           + jnp.sin(phase) * multiplier[1][None, :])
    return jnp.where((indices == ignored_index)[:, None], 0.0, res)


if __name__ == "__main__":
    embedding_dim = 32
    seq = 8

    div_term = make_positional_encoding_params(embedding_dim)

    key = jax.random.PRNGKey(0)
    indices = jax.random.randint(key, (seq,), 0, 50, dtype=jnp.int32)
    # include an ignored index to exercise the masking path
    indices = indices.at[3].set(-100)

    out = positional_encoding(indices, div_term)
    out = jax.block_until_ready(out)

    ref = _reference(indices, embedding_dim)
    assert out.shape == (seq, embedding_dim)
    assert out.dtype == jnp.float32
    assert jnp.allclose(out, ref, atol=1e-6, rtol=1e-6)

    print("KERNEL_OK")
</pallas_src>

<mosaic_0001>
module attributes {stable_mosaic.version = 11 : i64} {
  func.func @_pos_enc_kernel(%arg0: i32, %arg1: memref<8x1xi32, #tpu.memory_space<vmem>>, %arg2: memref<1x32xf32, #tpu.memory_space<vmem>>, %arg3: memref<8x32xf32, #tpu.memory_space<vmem>>) attributes {dimension_semantics = [#tpu.dimension_semantics<parallel>], iteration_bounds = array<i64: 1>, scalar_prefetch = 0 : i64, scratch_operands = 0 : i64, tpu.core_type = #tpu.core_type<tc>, window_params = [{transform_indices = @transform_0, window_bounds = array<i64: 8, 1>}, {pipeline_mode = #tpu.pipeline_mode<synchronous>, transform_indices = @transform_1, window_bounds = array<i64: 1, 32>}, {transform_indices = @transform_2, window_bounds = array<i64: 8, 32>}]} {
    %c0 = arith.constant 0 : index
    %c0_0 = arith.constant 0 : index
    %0 = vector.load %arg1[%c0, %c0_0] : memref<8x1xi32, #tpu.memory_space<vmem>>, vector<8x1xi32>
    %1 = arith.sitofp %0 : vector<8x1xi32> to vector<8x1xf32>
    %c0_1 = arith.constant 0 : index
    %c0_2 = arith.constant 0 : index
    %2 = vector.load %arg2[%c0_1, %c0_2] : memref<1x32xf32, #tpu.memory_space<vmem>>, vector<1x32xf32>
    %3 = vector.broadcast %1 : vector<8x1xf32> to vector<8x32xf32>
    %4 = vector.broadcast %2 : vector<1x32xf32> to vector<8x32xf32>
    %5 = arith.mulf %3, %4 : vector<8x32xf32>
    %6 = tpu.iota {dimensions = array<i32: 1>} : vector<1x32xi32>
    %c2_i32 = arith.constant 2 : i32
    %c0_i32 = arith.constant 0 : i32
    %7 = arith.cmpi eq, %c2_i32, %c0_i32 : i32
    %c1_i32 = arith.constant 1 : i32
    %8 = arith.select %7, %c1_i32, %c2_i32 : i32
    %9 = vector.broadcast %8 : i32 to vector<1x32xi32>
    %10 = arith.remsi %6, %9 : vector<1x32xi32>
    %c0_i32_3 = arith.constant 0 : i32
    %11 = vector.broadcast %c0_i32_3 : i32 to vector<1x32xi32>
    %12 = arith.cmpi ne, %10, %11 : vector<1x32xi32>
    %c0_i32_4 = arith.constant 0 : i32
    %13 = vector.broadcast %c0_i32_4 : i32 to vector<1x32xi32>
    %14 = arith.cmpi slt, %10, %13 : vector<1x32xi32>
    %c0_i32_5 = arith.constant 0 : i32
    %15 = arith.cmpi slt, %8, %c0_i32_5 : i32
    %16 = vector.broadcast %15 : i1 to vector<1x32xi1>
    %17 = vector.broadcast %16 : vector<1x32xi1> to vector<1x32xi1>
    %18 = arith.xori %14, %17 : vector<1x32xi1>
    %19 = arith.andi %18, %12 : vector<1x32xi1>
    %20 = vector.broadcast %8 : i32 to vector<1x32xi32>
    %21 = arith.addi %10, %20 : vector<1x32xi32>
    %22 = arith.select %19, %21, %10 : vector<1x32xi1>, vector<1x32xi32>
    %c1_i32_6 = arith.constant 1 : i32
    %23 = vector.broadcast %c1_i32_6 : i32 to vector<1x32xi32>
    %24 = arith.cmpi eq, %22, %23 : vector<1x32xi32>
    %25 = math.cos %5 : vector<8x32xf32>
    %26 = math.sin %5 : vector<8x32xf32>
    %27 = vector.shape_cast %24 : vector<1x32xi1> to vector<1x32xi1>
    %28 = vector.broadcast %27 : vector<1x32xi1> to vector<8x32xi1>
    %29 = arith.select %28, %25, %26 : vector<8x32xi1>, vector<8x32xf32>
    %c-100_i32 = arith.constant -100 : i32
    %30 = vector.broadcast %c-100_i32 : i32 to vector<8x1xi32>
    %31 = arith.cmpi eq, %0, %30 : vector<8x1xi32>
    %cst = arith.constant 0.000000e+00 : f32
    %32 = vector.shape_cast %31 : vector<8x1xi1> to vector<8x1xi1>
    %33 = vector.broadcast %32 : vector<8x1xi1> to vector<8x32xi1>
    %34 = vector.broadcast %cst : f32 to vector<8x32xf32>
    %35 = arith.select %33, %34, %29 : vector<8x32xi1>, vector<8x32xf32>
    %c0_7 = arith.constant 0 : index
    %c0_8 = arith.constant 0 : index
    %36 = vector.load %arg3[%c0_7, %c0_8] : memref<8x32xf32, #tpu.memory_space<vmem>>, vector<8x32xf32>
    tpu.vector_store %arg3[%c0_7, %c0_8], %35 {strides = array<i32>} : memref<8x32xf32, #tpu.memory_space<vmem>>, vector<8x32xf32>,
    return
  }
  func.func @transform_0(%arg0: i32) -> (i32, i32) {
    %c0_i32 = arith.constant 0 : i32
    %c0_i32_0 = arith.constant 0 : i32
    return %arg0, %c0_i32 : i32, i32
  }
  func.func @transform_1(%arg0: i32) -> (i32, i32) {
    %c0_i32 = arith.constant 0 : i32
    %c0_i32_0 = arith.constant 0 : i32
    %c0_i32_1 = arith.constant 0 : i32
    return %c0_i32, %c0_i32_0 : i32, i32
  }
  func.func @transform_2(%arg0: i32) -> (i32, i32) {
    %c0_i32 = arith.constant 0 : i32
    %c0_i32_0 = arith.constant 0 : i32
    return %arg0, %c0_i32 : i32, i32
  }
}

</mosaic_0001>

<llo_original>
// kernel: tpu_custom_call.1
$region0: #{tpu_custom_call.1}
  #allocation0 [shape = 'u32[]', space=smem, size = 0x4, offset = 0x4, fixed_abs, tag = 'smem constant byte address 0x4 - core index']
  #allocation1 [shape = 'u32[72,128]{1,0:T(1,128)}', space=vmem, size = 0x9000, scoped, tag = 'internal scratch']
  %s0 = inlined_call_operand.vmem [shape: s32[8,1], index: 0, kind: input, shape index: {}]
  %s1 = inlined_call_operand.vmem [shape: f32[1,32], index: 1, kind: input, shape index: {}]
  %s2 = inlined_call_operand.hbm [shape: f32[8,32], index: 2, kind: output, shape index: {}]
  %s3 = sld [smem:[#allocation0]]
  $region18: #{tpu_custom_call.1} parent=0
    _
  %s5 = ssub.s32 1, %s3
  %s6 = scalar_select 0, %s5, %s3
  $region1: #{tpu_custom_call.1} parent=0
    #allocation2 [shape = 'u8[4096]{0}', space=vmem, size = 0x1000, scoped, tag = 'output window, operand 0, single buffered']
    #allocation3 [shape = 's32[1]{0}', space=sflag, size = 0x4, scoped, tag = 'scoped memory for tpu_custom_call.1']
    %7 = vsyncpa [#allocation3], 0
    // Predicated region
    $region2: #{tpu_custom_call.1} parent=1 // pred_check
      _
    $region3: #{tpu_custom_call.1} parent=1 // pred_check_branch
      %9 = sbr.rel (0) target = $region5
    $region4: #{tpu_custom_call.1} parent=1 // pred_region
      _
    $region5: #{tpu_custom_call.1} parent=1 // pred_fallthru
      _
    // Predicated region
    $region6: #{tpu_custom_call.1} parent=1 // pred_check
      _
    $region7: #{tpu_custom_call.1} parent=1 // pred_check_branch
      %11 = sbr.rel (0) target = $region9
    $region8: #{tpu_custom_call.1} parent=1 // pred_region
      _
    $region9: #{tpu_custom_call.1} parent=1 // pred_fallthru
      _
    %v12 = vld [vmem:[%s0] sm:$0xff]
    %v13 = vcvt.s32.f32 %v12
    %v14 = vld [vmem:[%s1] sm:$0x1]
    %16 = vset.pattern.permute.xlu0 0
    %17 = vperm.xlu0 %16, %v13
    %v18 = vpop.permute.xlu0 %17
    %v21 = vperm.slane %v14, 0
    %v23 = vmul.f32 %v18, %v21
    %v24 = vlaneseq
    %v25 = vand.u32 %v24, 127
    %vm26 = vcmp.lt.s32.totalorder %v25, 0
    %v27 = vsub.s32 0, %v25
    %v28 = vsel %vm26, %v27, %v25
    %v29 = vshrl.u32 %v28, 1
    %v30 = vand.u32 %v28, 1
    %v31 = vsub.s32 0, %v30
    %v32 = vsel %vm26, %v31, %v30
    %vm33 = vcmp.ne.s32.totalorder %v32, 0
    %vm34 = vcmp.lt.s32.totalorder %v32, 0
    %vm35 = vmand %vm34, %vm33
    %v36 = vadd.s32 %v32, 2
    %v37 = vsel %vm35, %v36, %v32
    %vm38 = vcmp.eq.s32.totalorder %v37, 1
    %v39 = vand.u32 2147483647, %v23
    %vm40 = vcmp.le.f32.partialorder %v39, 0.7853982
    %vm41 = vcmp.lt.s32.totalorder %v23, 0
    %v42 = vand.u32 %v23, 2139095040
    %v43 = vshrl.u32 %v42, 23
    %v44 = vsub.s32 %v43, 127
    %v45 = vand.u32 2147483647, %v23
    %v46 = vand.u32 %v45, 8388607
    %v47 = vor.u32 %v46, 8388608
    %v48 = vsub.s32 0, %v47
    %v49 = vadd.s32 %v44, 1
    %vm50 = vcmp.gt.s32.totalorder %v49, 0
    %v51 = vsel %vm50, %v49, 0
    %v52 = vshrl.u32 %v51, 5
    %v53 = vand.u32 %v51, 31
    %v54 = vsub.s32 32, %v53
    %v55 = vshrl.u32 683565275, %v54
    %v56 = vshll.u32 683565275, %v53
    %v57 = vshrl.u32 2475754826, %v54
    %v58 = vor.u32 %v56, %v57
    %v59 = vshll.u32 2475754826, %v53
    %v60 = vshrl.u32 2131351028, %v54
    %v61 = vor.u32 %v59, %v60
    %v62 = vshll.u32 2131351028, %v53
    %v63 = vshrl.u32 2102212464, %v54
    %v64 = vor.u32 %v62, %v63
    %v65 = vshll.u32 2102212464, %v53
    %v66 = vshrl.u32 920167782, %v54
    %v67 = vor.u32 %v65, %v66
    %v68 = vshll.u32 920167782, %v53
    %v69 = vshrl.u32 1326507024, %v54
    %v70 = vor.u32 %v68, %v69
    %vm71 = vcmp.lt.s32.totalorder %v52, 1
    %vm72 = vcmp.lt.s32.totalorder %v52, 2
    %vm73 = vcmp.lt.s32.totalorder %v52, 3
    %vm74 = vcmp.lt.s32.totalorder %v52, 4
    %v75 = vsel %vm71, %v55, %v58
    %v76 = vsel %vm74, %v64, 2102212464
    %v77 = vsel %vm73, %v61, %v76
    %v78 = vsel %vm72, %v75, %v77
    %v79 = vsel %vm71, %v58, %v61
    %v80 = vsel %vm74, %v67, 920167782
    %v81 = vsel %vm73, %v64, %v80
    %v82 = vsel %vm72, %v79, %v81
    %v83 = vsel %vm71, %v61, %v64
    %v84 = vsel %vm74, %v70, 1326507024
    %v85 = vsel %vm73, %v67, %v84
    %v86 = vsel %vm72, %v83, %v85
    %v87 = vshll.u32 %v47, 8
    %v88 = vand.u32 %v87, 65535
    %v89 = vshrl.u32 %v87, 16
    %v90 = vand.u32 %v86, 65535
    %v91 = vshrl.u32 %v86, 16
    %v92 = vmul.u32 %v88, %v90
    %v93 = vmul.u32 %v88, %v91
    %v94 = vmul.u32 %v89, %v90
    %v95 = vmul.u32 %v89, %v91
    %v96 = vshll.u32 %v93, 16
    %v97 = vshrl.u32 %v93, 16
    %v98 = vshll.u32 %v94, 16
    %v99 = vshrl.u32 %v94, 16
    %vm100 = vc.u32 %v92, %v96
    %v101 = vsel %vm100, 1, 0
    %v102 = vadd.s32 %v92, %v96
    %v103 = vadd.s32 %v95, %v101
    %vm104 = vc.u32 %v102, %v98
    %v105 = vsel %vm104, 1, 0
    %v106 = vadd.s32 %v102, %v98
    %v107 = vadd.s32 %v103, %v105
    %v108 = vadd.s32 %v107, %v97
    %v109 = vadd.s32 %v108, %v99
    %v110 = vand.u32 %v87, 65535
    %v111 = vshrl.u32 %v87, 16
    %v112 = vand.u32 %v82, 65535
    %v113 = vshrl.u32 %v82, 16
    %v114 = vmul.u32 %v110, %v112
    %v115 = vmul.u32 %v110, %v113
    %v116 = vmul.u32 %v111, %v112
    %v117 = vmul.u32 %v111, %v113
    %v118 = vshll.u32 %v115, 16
    %v119 = vshrl.u32 %v115, 16
    %v120 = vshll.u32 %v116, 16
    %v121 = vshrl.u32 %v116, 16
    %vm122 = vc.u32 %v114, %v118
    %v123 = vsel %vm122, 1, 0
    %v124 = vadd.s32 %v114, %v118
    %v125 = vadd.s32 %v117, %v123
    %vm126 = vc.u32 %v124, %v120
    %v127 = vsel %vm126, 1, 0
    %v128 = vadd.s32 %v124, %v120
    %v129 = vadd.s32 %v125, %v127
    %v130 = vadd.s32 %v129, %v119
    %v131 = vadd.s32 %v130, %v121
    %v132 = vmul.u32 %v87, %v78
    %v133 = vadd.s32 %v109, %v128
    %vm134 = vc.u32 %v109, %v128
    %v135 = vadd.s32 %v131, 1
    %v136 = vsel %vm134, %v135, %v131
    %v137 = vadd.s32 %v132, %v136
    %v138 = vadd.s32 %v137, 536870912
    %v139 = vshrl.u32 %v138, 30
    %v140 = vshll.u32 %v139, 30
    %v141 = vsub.s32 %v137, %v140
    %vm142 = vcmp.lt.s32.totalorder %v141, 0
    %v143 = vsub.s32 0, %v141
    %v144 = vsel %vm142, %v143, %v141
    %v145 = vclz %v144
    %v146 = vsub.s32 %v145, 2
    %vm147 = vcmp.gt.s32.totalorder 0, %v146
    %v148 = vsel %vm147, 0, %v146
    %v149 = vsub.s32 32, %v148
    %v150 = vshll.u32 %v141, %v148
    %v151 = vshrl.u32 %v133, %v149
    %v152 = vor.u32 %v150, %v151
    %v153 = vsub.s32 4294967266, %v148
    %v154 = vadd.s32 %v153, 127
    %v155 = vshll.u32 %v154, 23
    %v156 = vor.u32 4788187, %v155
    %v157 = vand.u32 2147483647, %v156
    %v159 = vcvt.s32.f32 %v152
    %v160 = vmul.f32 %v159, %v157
    %v161 = vxor.u32 %v160, 2147483648
    %v162 = vsel %vm41, %v161, %v160
    %v163 = vsub.s32 4, %v139
    %v164 = vsel %vm41, %v163, %v139
    %v165 = vsel %vm40, %v23, %v162
    %v166 = vsel %vm40, 0, %v164
    %v167 = vmul.f32 %v165, %v165
    %v168 = vmul.f32 %v167, -0.001358992
    %v169 = vadd.f32 %v168, 0.041655596
    %v170 = vmul.f32 %v167, %v169
    %v171 = vadd.f32 %v170, -0.4999988
    %v172 = vmul.f32 %v167, %v171
    %v173 = vadd.f32 1.0, %v172
    %v174 = vmul.f32 %v165, %v165
    %v175 = vmul.f32 %v174, -0.00019511016
    %v176 = vadd.f32 %v175, 0.008332121
    %v177 = vmul.f32 %v174, %v176
    %v178 = vadd.f32 %v177, -0.16666654
    %v179 = vmul.f32 %v174, %v178
    %v180 = vadd.f32 %v179, 1.0
    %v181 = vmul.f32 %v180, %v165
    %vm182 = vweird.f32 %v23
    %v183 = vand.u32 %v166, 3
    %vm184 = vcmp.lt.s32.totalorder %v183, 2
    %vm185 = vcmp.eq.s32.totalorder %v183, 0
    %v186 = vxor.u32 %v181, 2147483648
    %v187 = vsel %vm185, %v173, %v186
    %vm188 = vcmp.eq.s32.totalorder %v183, 2
    %v189 = vxor.u32 %v173, 2147483648
    %v190 = vsel %vm188, %v189, %v181
    %v191 = vsel %vm184, %v187, %v190
    %v192 = vsel %vm182, nan, %v191
    %v193 = vand.u32 2147483647, %v23
    %vm194 = vcmp.le.f32.partialorder %v193, 0.7853982
    %vm195 = vcmp.lt.s32.totalorder %v23, 0
    %v196 = vand.u32 %v23, 2139095040
    %v197 = vshrl.u32 %v196, 23
    %v198 = vsub.s32 %v197, 127
    %v199 = vand.u32 2147483647, %v23
    %v200 = vand.u32 %v199, 8388607
    %v201 = vor.u32 %v200, 8388608
    %v202 = vsub.s32 0, %v201
    %v203 = vadd.s32 %v198, 1
    %vm204 = vcmp.gt.s32.totalorder %v203, 0
    %v205 = vsel %vm204, %v203, 0
    %v206 = vshrl.u32 %v205, 5
    %v207 = vand.u32 %v205, 31
    %v208 = vsub.s32 32, %v207
    %v209 = vshrl.u32 683565275, %v208
    %v210 = vshll.u32 683565275, %v207
    %v211 = vshrl.u32 2475754826, %v208
    %v212 = vor.u32 %v210, %v211
    %v213 = vshll.u32 2475754826, %v207
    %v214 = vshrl.u32 2131351028, %v208
    %v215 = vor.u32 %v213, %v214
    %v216 = vshll.u32 2131351028, %v207
    %v217 = vshrl.u32 2102212464, %v208
    %v218 = vor.u32 %v216, %v217
    %v219 = vshll.u32 2102212464, %v207
    %v220 = vshrl.u32 920167782, %v208
    %v221 = vor.u32 %v219, %v220
    %v222 = vshll.u32 920167782, %v207
    %v223 = vshrl.u32 1326507024, %v208
    %v224 = vor.u32 %v222, %v223
    %vm225 = vcmp.lt.s32.totalorder %v206, 1
    %vm226 = vcmp.lt.s32.totalorder %v206, 2
    %vm227 = vcmp.lt.s32.totalorder %v206, 3
    %vm228 = vcmp.lt.s32.totalorder %v206, 4
    %v229 = vsel %vm225, %v209, %v212
    %v230 = vsel %vm228, %v218, 2102212464
    %v231 = vsel %vm227, %v215, %v230
    %v232 = vsel %vm226, %v229, %v231
    %v233 = vsel %vm225, %v212, %v215
    %v234 = vsel %vm228, %v221, 920167782
    %v235 = vsel %vm227, %v218, %v234
    %v236 = vsel %vm226, %v233, %v235
    %v237 = vsel %vm225, %v215, %v218
    %v238 = vsel %vm228, %v224, 1326507024
    %v239 = vsel %vm227, %v221, %v238
    %v240 = vsel %vm226, %v237, %v239
    %v241 = vshll.u32 %v201, 8
    %v242 = vand.u32 %v241, 65535
    %v243 = vshrl.u32 %v241, 16
    %v244 = vand.u32 %v240, 65535
    %v245 = vshrl.u32 %v240, 16
    %v246 = vmul.u32 %v242, %v244
    %v247 = vmul.u32 %v242, %v245
    %v248 = vmul.u32 %v243, %v244
    %v249 = vmul.u32 %v243, %v245
    %v250 = vshll.u32 %v247, 16
    %v251 = vshrl.u32 %v247, 16
    %v252 = vshll.u32 %v248, 16
    %v253 = vshrl.u32 %v248, 16
    %vm254 = vc.u32 %v246, %v250
    %v255 = vsel %vm254, 1, 0
    %v256 = vadd.s32 %v246, %v250
    %v257 = vadd.s32 %v249, %v255
    %vm258 = vc.u32 %v256, %v252
    %v259 = vsel %vm258, 1, 0
    %v260 = vadd.s32 %v256, %v252
    %v261 = vadd.s32 %v257, %v259
    %v262 = vadd.s32 %v261, %v251
    %v263 = vadd.s32 %v262, %v253
    %v264 = vand.u32 %v241, 65535
    %v265 = vshrl.u32 %v241, 16
    %v266 = vand.u32 %v236, 65535
    %v267 = vshrl.u32 %v236, 16
    %v268 = vmul.u32 %v264, %v266
    %v269 = vmul.u32 %v264, %v267
    %v270 = vmul.u32 %v265, %v266
    %v271 = vmul.u32 %v265, %v267
    %v272 = vshll.u32 %v269, 16
    %v273 = vshrl.u32 %v269, 16
    %v274 = vshll.u32 %v270, 16
    %v275 = vshrl.u32 %v270, 16
    %vm276 = vc.u32 %v268, %v272
    %v277 = vsel %vm276, 1, 0
    %v278 = vadd.s32 %v268, %v272
    %v279 = vadd.s32 %v271, %v277
    %vm280 = vc.u32 %v278, %v274
    %v281 = vsel %vm280, 1, 0
    %v282 = vadd.s32 %v278, %v274
    %v283 = vadd.s32 %v279, %v281
    %v284 = vadd.s32 %v283, %v273
    %v285 = vadd.s32 %v284, %v275
    %v286 = vmul.u32 %v241, %v232
    %v287 = vadd.s32 %v263, %v282
    %vm288 = vc.u32 %v263, %v282
    %v289 = vadd.s32 %v285, 1
    %v290 = vsel %vm288, %v289, %v285
    %v291 = vadd.s32 %v286, %v290
    %v292 = vadd.s32 %v291, 536870912
    %v293 = vshrl.u32 %v292, 30
    %v294 = vshll.u32 %v293, 30
    %v295 = vsub.s32 %v291, %v294
    %vm296 = vcmp.lt.s32.totalorder %v295, 0
    %v297 = vsub.s32 0, %v295
    %v298 = vsel %vm296, %v297, %v295
    %v299 = vclz %v298
    %v300 = vsub.s32 %v299, 2
    %vm301 = vcmp.gt.s32.totalorder 0, %v300
    %v302 = vsel %vm301, 0, %v300
    %v303 = vsub.s32 32, %v302
    %v304 = vshll.u32 %v295, %v302
    %v305 = vshrl.u32 %v287, %v303
    %v306 = vor.u32 %v304, %v305
    %v307 = vsub.s32 4294967266, %v302
    %v308 = vadd.s32 %v307, 127
    %v309 = vshll.u32 %v308, 23
    %v310 = vor.u32 4788187, %v309
    %v311 = vand.u32 2147483647, %v310
    %v313 = vcvt.s32.f32 %v306
    %v314 = vmul.f32 %v313, %v311
    %v315 = vxor.u32 %v314, 2147483648
    %v316 = vsel %vm195, %v315, %v314
    %v317 = vsub.s32 4, %v293
    %v318 = vsel %vm195, %v317, %v293
    %v319 = vsel %vm194, %v23, %v316
    %v320 = vsel %vm194, 0, %v318
    %v321 = vmul.f32 %v319, %v319
    %v322 = vmul.f32 %v321, -0.001358992
    %v323 = vadd.f32 %v322, 0.041655596
    %v324 = vmul.f32 %v321, %v323
    %v325 = vadd.f32 %v324, -0.4999988
    %v326 = vmul.f32 %v321, %v325
    %v327 = vadd.f32 1.0, %v326
    %v328 = vmul.f32 %v319, %v319
    %v329 = vmul.f32 %v328, -0.00019511016
    %v330 = vadd.f32 %v329, 0.008332121
    %v331 = vmul.f32 %v328, %v330
    %v332 = vadd.f32 %v331, -0.16666654
    %v333 = vmul.f32 %v328, %v332
    %v334 = vadd.f32 %v333, 1.0
    %v335 = vmul.f32 %v334, %v319
    %vm336 = vweird.f32 %v23
    %v337 = vadd.s32 %v320, 3
    %v338 = vand.u32 %v337, 3
    %vm339 = vcmp.lt.s32.totalorder %v338, 2
    %vm340 = vcmp.eq.s32.totalorder %v338, 0
    %v341 = vxor.u32 %v335, 2147483648
    %v342 = vsel %vm340, %v327, %v341
    %vm343 = vcmp.eq.s32.totalorder %v338, 2
    %v344 = vxor.u32 %v327, 2147483648
    %v345 = vsel %vm343, %v344, %v335
    %v346 = vsel %vm339, %v342, %v345
    %v347 = vsel %vm336, nan, %v346
    %v348 = vsel %vm38, 1, 0
    %vm349 = vcmp.eq.s32.totalorder %v348, 1
    %v350 = vsel %vm349, %v192, %v347
    %vm351 = vcmp.eq.s32.totalorder %v12, 4294967196
    %v352 = vsel %vm351, 1, 0
    %353 = vset.pattern.permute.xlu0 0
    %354 = vperm.xlu0 %353, %v352
    %v355 = vpop.permute.xlu0 %354
    %vm356 = vcmp.eq.s32.totalorder %v355, 1
    %v357 = vsel %vm356, 0.0, %v350
    %vm358 = vcmask 261120
    %359 = vst.msk [vmem:[#allocation2] sm:$0xff] %vm358, %v357
    // Predicated region
    $region10: #{tpu_custom_call.1} parent=1 // pred_check
      _
    $region11: #{tpu_custom_call.1} parent=1 // pred_check_branch
      %361 = sbr.rel (0) target = $region13
    $region12: #{tpu_custom_call.1} parent=1 // pred_region
      %363 = vsyncadd [#allocation3], 0
      %s365 = sshll.u32 [#allocation2], 4
      %s366 = int_to_ptr.vmem [resolvable:$true] %s365
      %s367 = sshll.u32 %s2, 4
      %s368 = int_to_ptr.hbm [resolvable:$true] %s367
      %370 = dma.vmem_to_hbm [thread:$0]  %s366, 128, %s368, [#allocation3]
    $region13: #{tpu_custom_call.1} parent=1 // pred_fallthru
      _
    // Predicated region
    $region14: #{tpu_custom_call.1} parent=1 // pred_check
      _
    $region15: #{tpu_custom_call.1} parent=1 // pred_check_branch
      %372 = sbr.rel (0) target = $region17
    $region16: #{tpu_custom_call.1} parent=1 // pred_region
      %374 = dma.done [#allocation3], 128
    $region17: #{tpu_custom_call.1} parent=1 // pred_fallthru
      _
    %375 = vsyncpa [#allocation3], 1

</llo_original>
